<compile_context>
chip_gen: v5e
topology: v5e:2x2
jax: 0.10.0
libtpu: 0.0.40
codegen_flags: <defaults>
</compile_context>

<pallas_src>
import jax
import jax.numpy as jnp
from jax.experimental import pallas as pl
from jax.experimental.pallas import tpu as pltpu


def _round_up(x, m):
    return ((x + m - 1) // m) * m


def _mlp_kernel(x_ref, w1_ref, b1_ref, w2_ref, b2_ref, o_ref):
    k = pl.program_id(1)

    @pl.when(k == 0)
    def _():
        o_ref[...] = jnp.zeros_like(o_ref)

    # fc1 slab: (block_b, D_p) @ (D_p, tile_h) -> f32 on the MXU.
    h = jnp.dot(x_ref[...], w1_ref[...], preferred_element_type=jnp.float32)
    # Bias + ReLU in f32 (cheap VPU path on all chips, incl. v5e).
    h = jnp.maximum(h + b1_ref[...], 0.0)

    # fc2 partial: (block_b, tile_h) @ (tile_h, O_p), accumulated in the
    # resident f32 output block.
    o_ref[...] += jnp.dot(h.astype(w2_ref.dtype), w2_ref[...],
                          preferred_element_type=jnp.float32)

    @pl.when(k == pl.num_programs(1) - 1)
    def _():
        o_ref[...] += b2_ref[...]


def mlp_forward(x, w1, b1, w2, b2, *, block_b=None, compute_dtype=jnp.bfloat16):
    """relu(x @ w1 + b1) @ w2 + b2  (PyTorch nn.Linear semantics; weights are
    stored transposed as (in_features, out_features))."""
    B, D = x.shape
    H = w1.shape[1]
    O = w2.shape[1]

    # ---- MXU / lane alignment: pad all matmul dims to multiples of 128. ----
    D_p = _round_up(D, 128)
    H_p = _round_up(H, 128)
    O_p = _round_up(O, 128)

    # Hidden tile: largest multiple of 128 (<= 512) that divides H_p.
    n128 = H_p // 128
    tile_h = 128
    for cand in (4, 3, 2, 1):
        if n128 % cand == 0:
            tile_h = 128 * cand
            break

    # Batch tile: multiple of 16 (bf16 sublane packing); shrink until the tile
    # working set fits comfortably inside scoped VMEM.
    if block_b is None:
        block_b = min(_round_up(B, 16), 512)
    block_b = max(16, _round_up(block_b, 16))

    def vmem_bytes(bb):
        in_b = 2 * 2 * (bb * D_p + D_p * tile_h + tile_h * O_p)   # bf16 inputs, dbl-buffered
        bias_b = 2 * 4 * (tile_h + O_p)                            # f32 biases, dbl-buffered
        out_b = 2 * 4 * bb * O_p                                   # f32 out/acc tile, dbl-buffered
        tmp_b = 4 * bb * tile_h                                    # f32 h slab
        return in_b + bias_b + out_b + tmp_b

    while block_b > 16 and vmem_bytes(block_b) > (40 << 20):
        block_b = max(16, _round_up(block_b // 2, 16))

    B_p = _round_up(B, block_b)

    # ---- Pad + cast once in the wrapper.  Zero padding is exact: padded w1
    # cols / b1 entries give h = 0, relu(0) = 0, padded w2 rows are 0, and the
    # padded output rows/cols are sliced off below. ----
    f32 = jnp.float32
    x_p = jnp.zeros((B_p, D_p), compute_dtype).at[:B, :D].set(x.astype(compute_dtype))
    w1_p = jnp.zeros((D_p, H_p), compute_dtype).at[:D, :H].set(w1.astype(compute_dtype))
    b1_p = jnp.zeros((1, H_p), f32).at[0, :H].set(b1.astype(f32))
    w2_p = jnp.zeros((H_p, O_p), compute_dtype).at[:H, :O].set(w2.astype(compute_dtype))
    b2_p = jnp.zeros((1, O_p), f32).at[0, :O].set(b2.astype(f32))

    grid = (B_p // block_b, H_p // tile_h)

    flops = 2 * B_p * D_p * H_p + 2 * B_p * H_p * O_p
    bytes_accessed = (x_p.size * 2 + (w1_p.size + w2_p.size) * 2 * grid[0]
                      + b1_p.size * 4 + b2_p.size * 4 + B_p * O_p * 4)
    vmem_limit = max(32 << 20, min(int(vmem_bytes(block_b) * 1.5) + (2 << 20), 60 << 20))

    out = pl.pallas_call(
        _mlp_kernel,
        out_shape=jax.ShapeDtypeStruct((B_p, O_p), f32),
        grid_spec=pltpu.PrefetchScalarGridSpec(
            num_scalar_prefetch=0,
            grid=grid,
            in_specs=[
                pl.BlockSpec((block_b, D_p), lambda i, k: (i, 0)),   # x batch tile (resident over k)
                pl.BlockSpec((D_p, tile_h), lambda i, k: (0, k)),    # w1 K-slice
                pl.BlockSpec((1, tile_h), lambda i, k: (0, k)),      # b1 K-slice
                pl.BlockSpec((tile_h, O_p), lambda i, k: (k, 0)),    # w2 K-slice
                pl.BlockSpec((1, O_p), lambda i, k: (0, 0)),         # b2 (resident)
            ],
            out_specs=pl.BlockSpec((block_b, O_p), lambda i, k: (i, 0)),
        ),
        compiler_params=pltpu.CompilerParams(
            dimension_semantics=("parallel", "arbitrary"),
            vmem_limit_bytes=vmem_limit,
        ),
        cost_estimate=pl.CostEstimate(
            flops=flops, transcendentals=0, bytes_accessed=bytes_accessed),
    )(x_p, w1_p, b1_p, w2_p, b2_p)

    return out[:B, :O]


if __name__ == "__main__":
    def make_params(key, input_dim, hidden_dim, output_dim, batch):
        kx, k1, k2, k3, k4 = jax.random.split(key, 5)
        x = jax.random.normal(kx, (batch, input_dim), jnp.float32)
        bound1 = 1.0 / jnp.sqrt(jnp.float32(input_dim))
        bound2 = 1.0 / jnp.sqrt(jnp.float32(hidden_dim))
        w1 = jax.random.uniform(k1, (input_dim, hidden_dim), jnp.float32, -bound1, bound1)
        b1 = jax.random.uniform(k2, (hidden_dim,), jnp.float32, -bound1, bound1)
        w2 = jax.random.uniform(k3, (hidden_dim, output_dim), jnp.float32, -bound2, bound2)
        b2 = jax.random.uniform(k4, (output_dim,), jnp.float32, -bound2, bound2)
        return x, w1, b1, w2, b2

    def reference_bf16(x, w1, b1, w2, b2):
        # Same math path as the kernel: bf16 operands, f32 accumulation, f32
        # bias/ReLU, fc1 activations downcast to bf16 before fc2.
        xb, w1b, w2b = (a.astype(jnp.bfloat16) for a in (x, w1, w2))
        h = jnp.dot(xb, w1b, preferred_element_type=jnp.float32) + b1.astype(jnp.float32)
        h = jnp.maximum(h, 0.0).astype(jnp.bfloat16)
        return jnp.dot(h, w2b, preferred_element_type=jnp.float32) + b2.astype(jnp.float32)

    # Case 1: small ragged shapes (exercises padding on every dim, 1x1 grid).
    x, w1, b1, w2, b2 = make_params(jax.random.PRNGKey(0), 48, 80, 24, batch=30)
    out = jax.block_until_ready(mlp_forward(x, w1, b1, w2, b2))
    ref = reference_bf16(x, w1, b1, w2, b2)
    assert out.shape == (30, 24)
    assert jnp.allclose(out, ref, atol=1e-2, rtol=1e-2), "case-1 mismatch vs reference"

    # Case 2: multi-tile grid (batch tiles x hidden-K accumulation).
    x, w1, b1, w2, b2 = make_params(jax.random.PRNGKey(0), 160, 640, 96, batch=200)
    out = jax.block_until_ready(mlp_forward(x, w1, b1, w2, b2, block_b=64))
    ref = reference_bf16(x, w1, b1, w2, b2)
    assert out.shape == (200, 96)
    assert jnp.allclose(out, ref, atol=1e-2, rtol=1e-2), "case-2 mismatch vs reference"

    print("KERNEL_OK")
</pallas_src>

<mosaic_0001>
module attributes {stable_mosaic.version = 11 : i64} {
  func.func @_mlp_kernel(%arg0: i32, %arg1: i32, %arg2: memref<32x128xbf16, #tpu.memory_space<vmem>>, %arg3: memref<128x128xbf16, #tpu.memory_space<vmem>>, %arg4: memref<1x128xf32, #tpu.memory_space<vmem>>, %arg5: memref<128x128xbf16, #tpu.memory_space<vmem>>, %arg6: memref<1x128xf32, #tpu.memory_space<vmem>>, %arg7: memref<32x128xf32, #tpu.memory_space<vmem>>) attributes {dimension_semantics = [#tpu.dimension_semantics<parallel>, #tpu.dimension_semantics<arbitrary>], iteration_bounds = array<i64: 1, 1>, scalar_prefetch = 0 : i64, scratch_operands = 0 : i64, tpu.core_type = #tpu.core_type<tc>, window_params = [{transform_indices = @transform_0, window_bounds = array<i64: 32, 128>}, {transform_indices = @transform_1, window_bounds = array<i64: 128, 128>}, {transform_indices = @transform_2, window_bounds = array<i64: 1, 128>}, {transform_indices = @transform_3, window_bounds = array<i64: 128, 128>}, {pipeline_mode = #tpu.pipeline_mode<synchronous>, transform_indices = @transform_4, window_bounds = array<i64: 1, 128>}, {transform_indices = @transform_5, window_bounds = array<i64: 32, 128>}]} {
    %c0_i32 = arith.constant 0 : i32
    %0 = arith.cmpi eq, %arg1, %c0_i32 : i32
    %1 = arith.extui %0 : i1 to i32
    %c0_i32_0 = arith.constant 0 : i32
    %2 = arith.cmpi ne, %1, %c0_i32_0 : i32
    scf.if %2 {
      %cst_16 = arith.constant 0.000000e+00 : f32
      %20 = vector.broadcast %cst_16 : f32 to vector<32x128xf32>
      %c0_17 = arith.constant 0 : index
      %c0_18 = arith.constant 0 : index
      %21 = vector.load %arg7[%c0_17, %c0_18] : memref<32x128xf32, #tpu.memory_space<vmem>>, vector<32x128xf32>
      tpu.vector_store %arg7[%c0_17, %c0_18], %20 {strides = array<i32>} : memref<32x128xf32, #tpu.memory_space<vmem>>, vector<32x128xf32>,
    } else {
    }
    %c0 = arith.constant 0 : index
    %c0_1 = arith.constant 0 : index
    %3 = vector.load %arg2[%c0, %c0_1] : memref<32x128xbf16, #tpu.memory_space<vmem>>, vector<32x128xbf16>
    %c0_2 = arith.constant 0 : index
    %c0_3 = arith.constant 0 : index
    %4 = vector.load %arg3[%c0_2, %c0_3] : memref<128x128xbf16, #tpu.memory_space<vmem>>, vector<128x128xbf16>
    %cst = arith.constant dense<0.000000e+00> : vector<32x128xf32>
    %5 = tpu.matmul %3, %4, %cst {dimension_numbers = #tpu.dot_dimension_numbers<[1], [0], [0], [1], [0, 0, 1, 1], [], []>} : vector<32x128xbf16>, vector<128x128xbf16>, vector<32x128xf32> -> vector<32x128xf32>
    %c0_4 = arith.constant 0 : index
    %c0_5 = arith.constant 0 : index
    %6 = vector.load %arg4[%c0_4, %c0_5] : memref<1x128xf32, #tpu.memory_space<vmem>>, vector<1x128xf32>
    %7 = vector.broadcast %6 : vector<1x128xf32> to vector<32x128xf32>
    %8 = arith.addf %5, %7 : vector<32x128xf32>
    %cst_6 = arith.constant 0.000000e+00 : f32
    %9 = vector.broadcast %cst_6 : f32 to vector<32x128xf32>
    %10 = arith.maximumf %8, %9 : vector<32x128xf32>
    %c0_7 = arith.constant 0 : index
    %c0_8 = arith.constant 0 : index
    %11 = vector.load %arg7[%c0_7, %c0_8] : memref<32x128xf32, #tpu.memory_space<vmem>>, vector<32x128xf32>
    %12 = arith.truncf %10 : vector<32x128xf32> to vector<32x128xbf16>
    %c0_9 = arith.constant 0 : index
    %c0_10 = arith.constant 0 : index
    %13 = vector.load %arg5[%c0_9, %c0_10] : memref<128x128xbf16, #tpu.memory_space<vmem>>, vector<128x128xbf16>
    %cst_11 = arith.constant dense<0.000000e+00> : vector<32x128xf32>
    %14 = tpu.matmul %12, %13, %cst_11 {dimension_numbers = #tpu.dot_dimension_numbers<[1], [0], [0], [1], [0, 0, 1, 1], [], []>} : vector<32x128xbf16>, vector<128x128xbf16>, vector<32x128xf32> -> vector<32x128xf32>
    %15 = arith.addf %11, %14 : vector<32x128xf32>
    %c0_12 = arith.constant 0 : index
    %c0_13 = arith.constant 0 : index
    %16 = vector.load %arg7[%c0_12, %c0_13] : memref<32x128xf32, #tpu.memory_space<vmem>>, vector<32x128xf32>
    tpu.vector_store %arg7[%c0_12, %c0_13], %15 {strides = array<i32>} : memref<32x128xf32, #tpu.memory_space<vmem>>, vector<32x128xf32>,
    %c0_i32_14 = arith.constant 0 : i32
    %17 = arith.cmpi eq, %arg1, %c0_i32_14 : i32
    %18 = arith.extui %17 : i1 to i32
    %c0_i32_15 = arith.constant 0 : i32
    %19 = arith.cmpi ne, %18, %c0_i32_15 : i32
    scf.if %19 {
      %c0_16 = arith.constant 0 : index
      %c0_17 = arith.constant 0 : index
      %20 = vector.load %arg7[%c0_16, %c0_17] : memref<32x128xf32, #tpu.memory_space<vmem>>, vector<32x128xf32>
      %c0_18 = arith.constant 0 : index
      %c0_19 = arith.constant 0 : index
      %21 = vector.load %arg6[%c0_18, %c0_19] : memref<1x128xf32, #tpu.memory_space<vmem>>, vector<1x128xf32>
      %22 = vector.broadcast %21 : vector<1x128xf32> to vector<32x128xf32>
      %23 = arith.addf %20, %22 : vector<32x128xf32>
      %c0_20 = arith.constant 0 : index
      %c0_21 = arith.constant 0 : index
      %24 = vector.load %arg7[%c0_20, %c0_21] : memref<32x128xf32, #tpu.memory_space<vmem>>, vector<32x128xf32>
      tpu.vector_store %arg7[%c0_20, %c0_21], %23 {strides = array<i32>} : memref<32x128xf32, #tpu.memory_space<vmem>>, vector<32x128xf32>,
    } else {
    }
    return
  }
  func.func @transform_0(%arg0: i32, %arg1: i32) -> (i32, i32) {
    %c0_i32 = arith.constant 0 : i32
    %c0_i32_0 = arith.constant 0 : i32
    return %arg0, %c0_i32 : i32, i32
  }
  func.func @transform_1(%arg0: i32, %arg1: i32) -> (i32, i32) {
    %c0_i32 = arith.constant 0 : i32
    %c0_i32_0 = arith.constant 0 : i32
    return %c0_i32, %arg1 : i32, i32
  }
  func.func @transform_2(%arg0: i32, %arg1: i32) -> (i32, i32) {
    %c0_i32 = arith.constant 0 : i32
    %c0_i32_0 = arith.constant 0 : i32
    return %c0_i32, %arg1 : i32, i32
  }
  func.func @transform_3(%arg0: i32, %arg1: i32) -> (i32, i32) {
    %c0_i32 = arith.constant 0 : i32
    %c0_i32_0 = arith.constant 0 : i32
    return %arg1, %c0_i32 : i32, i32
  }
  func.func @transform_4(%arg0: i32, %arg1: i32) -> (i32, i32) {
    %c0_i32 = arith.constant 0 : i32
    %c0_i32_0 = arith.constant 0 : i32
    %c0_i32_1 = arith.constant 0 : i32
    return %c0_i32, %c0_i32_0 : i32, i32
  }
  func.func @transform_5(%arg0: i32, %arg1: i32) -> (i32, i32) {
    %c0_i32 = arith.constant 0 : i32
    %c0_i32_0 = arith.constant 0 : i32
    return %arg0, %c0_i32 : i32, i32
  }
}

</mosaic_0001>

<llo_original>
// kernel: tpu_custom_call.1
$region0: #{tpu_custom_call.1}
  #allocation0 [shape = 'u32[]', space=smem, size = 0x4, offset = 0x4, fixed_abs, tag = 'smem constant byte address 0x4 - core index']
  #allocation1 [shape = 'u32[72,128]{1,0:T(1,128)}', space=vmem, size = 0x9000, scoped, tag = 'internal scratch']
  %s0 = inlined_call_operand.hbm [shape: bf16[32,128], index: 0, kind: input, shape index: {}]
  %s1 = inlined_call_operand.hbm [shape: bf16[128,128], index: 1, kind: input, shape index: {}]
  %s2 = inlined_call_operand.vmem [shape: f32[1,128], index: 2, kind: input, shape index: {}]
  %s3 = inlined_call_operand.hbm [shape: bf16[128,128], index: 3, kind: input, shape index: {}]
  %s4 = inlined_call_operand.vmem [shape: f32[1,128], index: 4, kind: input, shape index: {}]
  %s5 = inlined_call_operand.hbm [shape: f32[32,128], index: 5, kind: output, shape index: {}]
  %s6 = sld [smem:[#allocation0]]
  $region50: #{tpu_custom_call.1} parent=0
    _
  %s8 = ssub.s32 1, %s6
  %s9 = scalar_select 0, %s8, %s6
  $region1: #{tpu_custom_call.1} parent=0
    #allocation2 [shape = 'u8[8192]{0}', space=vmem, size = 0x2000, scoped, tag = 'input window, operand 0, single buffered']
    #allocation3 [shape = 's32[1]{0}', space=sflag, size = 0x4, scoped, tag = 'scoped memory for tpu_custom_call.1']
    #allocation4 [shape = 's32[1]{0}', space=sflag, size = 0x4, scoped, tag = 'scoped memory for tpu_custom_call.1']
    #allocation5 [shape = 'u8[32768]{0}', space=vmem, size = 0x8000, scoped, tag = 'input window, operand 1, single buffered']
    #allocation6 [shape = 's32[1]{0}', space=sflag, size = 0x4, scoped, tag = 'scoped memory for tpu_custom_call.1']
    #allocation7 [shape = 'u8[32768]{0}', space=vmem, size = 0x8000, scoped, tag = 'input window, operand 3, single buffered']
    #allocation8 [shape = 'u8[16384]{0}', space=vmem, size = 0x4000, scoped, tag = 'output window, operand 0, single buffered']
    %10 = vsyncpa [#allocation3], 0
    %11 = vsyncpa [#allocation6], 0
    %12 = vsyncpa [#allocation4], 0
    // Predicated region
    $region2: #{tpu_custom_call.1} parent=1 // pred_check
      _
    $region3: #{tpu_custom_call.1} parent=1 // pred_check_branch
      %14 = sbr.rel (0) target = $region5
    $region4: #{tpu_custom_call.1} parent=1 // pred_region
      %16 = vsyncadd [#allocation3], 0
      %s17 = sshll.u32 %s0, 4
      %s18 = int_to_ptr.hbm [resolvable:$true] %s17
      %s19 = sshll.u32 [#allocation2], 4
      %s20 = int_to_ptr.vmem [resolvable:$true] %s19
      %25 = dma.hbm_to_vmem [thread:$0]  %s18, 256, %s20, [#allocation3], 64, 64, 4
    $region5: #{tpu_custom_call.1} parent=1 // pred_fallthru
      _
    // Predicated region
    $region6: #{tpu_custom_call.1} parent=1 // pred_check
      _
    $region7: #{tpu_custom_call.1} parent=1 // pred_check_branch
      %27 = sbr.rel (0) target = $region9
    $region8: #{tpu_custom_call.1} parent=1 // pred_region
      %29 = vsyncadd [#allocation6], 0
      %s30 = sshll.u32 %s1, 4
      %s31 = int_to_ptr.hbm [resolvable:$true] %s30
      %s32 = sshll.u32 [#allocation5], 4
      %s33 = int_to_ptr.vmem [resolvable:$true] %s32
      %38 = dma.hbm_to_vmem [thread:$0]  %s31, 1024, %s33, [#allocation6], 64, 64, 4
    $region9: #{tpu_custom_call.1} parent=1 // pred_fallthru
      _
    // Predicated region
    $region10: #{tpu_custom_call.1} parent=1 // pred_check
      _
    $region11: #{tpu_custom_call.1} parent=1 // pred_check_branch
      %40 = sbr.rel (0) target = $region13
    $region12: #{tpu_custom_call.1} parent=1 // pred_region
      _
    $region13: #{tpu_custom_call.1} parent=1 // pred_fallthru
      _
    // Predicated region
    $region14: #{tpu_custom_call.1} parent=1 // pred_check
      _
    $region15: #{tpu_custom_call.1} parent=1 // pred_check_branch
      %42 = sbr.rel (0) target = $region17
    $region16: #{tpu_custom_call.1} parent=1 // pred_region
      %44 = vsyncadd [#allocation6], 0
      %s45 = sshll.u32 %s3, 4
      %s46 = int_to_ptr.hbm [resolvable:$true] %s45
      %s47 = sshll.u32 [#allocation7], 4
      %s48 = int_to_ptr.vmem [resolvable:$true] %s47
      %53 = dma.hbm_to_vmem [thread:$0]  %s46, 1024, %s48, [#allocation6], 64, 64, 4
    $region17: #{tpu_custom_call.1} parent=1 // pred_fallthru
      _
    // Predicated region
    $region18: #{tpu_custom_call.1} parent=1 // pred_check
      _
    $region19: #{tpu_custom_call.1} parent=1 // pred_check_branch
      %55 = sbr.rel (0) target = $region21
    $region20: #{tpu_custom_call.1} parent=1 // pred_region
      _
    $region21: #{tpu_custom_call.1} parent=1 // pred_fallthru
      _
    // Predicated region
    $region22: #{tpu_custom_call.1} parent=1 // pred_check
      _
    $region23: #{tpu_custom_call.1} parent=1 // pred_check_branch
      %57 = sbr.rel (0) target = $region25
    $region24: #{tpu_custom_call.1} parent=1 // pred_region
      %59 = dma.done [#allocation3], 256
    $region25: #{tpu_custom_call.1} parent=1 // pred_fallthru
      _
    // Predicated region
    $region26: #{tpu_custom_call.1} parent=1 // pred_check
      _
    $region27: #{tpu_custom_call.1} parent=1 // pred_check_branch
      %61 = sbr.rel (0) target = $region29
    $region28: #{tpu_custom_call.1} parent=1 // pred_region
      %63 = dma.done [#allocation6], 1024
    $region29: #{tpu_custom_call.1} parent=1 // pred_fallthru
      _
    // Predicated region
    $region30: #{tpu_custom_call.1} parent=1 // pred_check
      _
    $region31: #{tpu_custom_call.1} parent=1 // pred_check_branch
      %65 = sbr.rel (0) target = $region33
    $region32: #{tpu_custom_call.1} parent=1 // pred_region
      %67 = dma.done [#allocation6], 1024
    $region33: #{tpu_custom_call.1} parent=1 // pred_fallthru
      _
    %p68 = scmp.eq.s32.totalorder 0, 0
    // Predicated region
    $region34: #{tpu_custom_call.1} parent=1 // pred_check
      %p69 = pneg %p68
    $region35: #{tpu_custom_call.1} parent=1 // pred_check_branch
      %71 = sbr.rel (%p69) target = $region37
    $region36: #{tpu_custom_call.1} parent=1 // pred_region
      %72 = vst [vmem:[#allocation8] sm:$0xff] 0.0
      %73 = vst [vmem:[#allocation8 + $0x8] sm:$0xff] 0.0
      %74 = vst [vmem:[#allocation8 + $0x10] sm:$0xff] 0.0
      %75 = vst [vmem:[#allocation8 + $0x18] sm:$0xff] 0.0
    $region37: #{tpu_custom_call.1} parent=1 // pred_fallthru
      _
    %v76 = vld [vmem:[#allocation2] sm:$0xf]
    %v77 = vld [vmem:[#allocation2 + $0x4] sm:$0xf]
    %v78 = vld [vmem:[#allocation2 + $0x8] sm:$0xf]
    %v79 = vld [vmem:[#allocation2 + $0xc] sm:$0xf]
    %v80 = vld [vmem:[#allocation5] sm:$0xf]
    %v81 = vld [vmem:[#allocation5 + $0x4] sm:$0xf]
    %v82 = vld [vmem:[#allocation5 + $0x8] sm:$0xf]
    %v83 = vld [vmem:[#allocation5 + $0xc] sm:$0xf]
    %v84 = vld [vmem:[#allocation5 + $0x10] sm:$0xf]
    %v85 = vld [vmem:[#allocation5 + $0x14] sm:$0xf]
    %v86 = vld [vmem:[#allocation5 + $0x18] sm:$0xf]
    %v87 = vld [vmem:[#allocation5 + $0x1c] sm:$0xf]
    %v88 = vld [vmem:[#allocation5 + $0x20] sm:$0xf]
    %v89 = vld [vmem:[#allocation5 + $0x24] sm:$0xf]
    %v90 = vld [vmem:[#allocation5 + $0x28] sm:$0xf]
    %v91 = vld [vmem:[#allocation5 + $0x2c] sm:$0xf]
    %v92 = vld [vmem:[#allocation5 + $0x30] sm:$0xf]
    %v93 = vld [vmem:[#allocation5 + $0x34] sm:$0xf]
    %v94 = vld [vmem:[#allocation5 + $0x38] sm:$0xf]
    %v95 = vld [vmem:[#allocation5 + $0x3c] sm:$0xf]
    %v96 = vld [vmem:[%s2] sm:$0x1]
    %v98 = vperm.slane %v96, 0
    %v104 = vunpack.c.l.b16 %v76
    %v105 = vunpack.c.l.b16 %v77
    %v106 = vunpack.c.l.b16 %v78
    %v107 = vunpack.c.l.b16 %v79
    %v108 = vpack.c.b16 %v105, %v104
    %v109 = vpack.c.b16 %v107, %v106
    %v128 = vunpack.c.l.b16 %v80
    %v129 = vunpack.c.l.b16 %v81
    %v130 = vunpack.c.l.b16 %v82
    %v131 = vunpack.c.l.b16 %v83
    %v132 = vunpack.c.l.b16 %v84
    %v133 = vunpack.c.l.b16 %v85
    %v134 = vunpack.c.l.b16 %v86
    %v135 = vunpack.c.l.b16 %v87
    %v136 = vunpack.c.l.b16 %v88
    %v137 = vunpack.c.l.b16 %v89
    %v138 = vunpack.c.l.b16 %v90
    %v139 = vunpack.c.l.b16 %v91
    %v140 = vunpack.c.l.b16 %v92
    %v141 = vunpack.c.l.b16 %v93
    %v142 = vunpack.c.l.b16 %v94
    %v143 = vunpack.c.l.b16 %v95
    %v144 = vpack.c.b16 %v129, %v128
    %v145 = vpack.c.b16 %v131, %v130
    %v146 = vpack.c.b16 %v133, %v132
    %v147 = vpack.c.b16 %v135, %v134
    %v148 = vpack.c.b16 %v137, %v136
    %v149 = vpack.c.b16 %v139, %v138
    %v150 = vpack.c.b16 %v141, %v140
    %v151 = vpack.c.b16 %v143, %v142
    %160 = vmatpush.bf16.msra.mxu0 %v151
    %161 = vmatpush.bf16.msra.mxu0 %v150
    %162 = vmatpush.bf16.msra.mxu0 %v149
    %163 = vmatpush.bf16.msra.mxu0 %v148
    %164 = vmatpush.bf16.msra.mxu0 %v147
    %165 = vmatpush.bf16.msra.mxu0 %v146
    %166 = vmatpush.bf16.msra.mxu0 %v145
    %167 = vmatpush.bf16.msra.mxu0 %v144
    %168 = vmatmul.bf16.gmra.mxu0 %v108
    %v169 = vpop.f32.mrf.mxu0
    %v170 = vadd.f32 %v98, %v169
    %v171 = vpop.f32.mrf.mxu0
    %v172 = vadd.f32 %v98, %v171
    %173 = vmatmul.bf16.gmra.mxu0 %v109
    %v174 = vpop.f32.mrf.mxu0
    %v175 = vadd.f32 %v98, %v174
    %v176 = vpop.f32.mrf.mxu0
    %v177 = vadd.f32 %v98, %v176
    %178 = vdwg.mxu0
    %v179 = vmax.f32 %v170, 0.0
    %v180 = vmax.f32 %v172, 0.0
    %v181 = vmax.f32 %v175, 0.0
    %v182 = vmax.f32 %v177, 0.0
    %v183 = vld [vmem:[#allocation8] sm:$0xff]
    %v184 = vld [vmem:[#allocation8 + $0x8] sm:$0xff]
    %v185 = vld [vmem:[#allocation8 + $0x10] sm:$0xff]
    %v186 = vld [vmem:[#allocation8 + $0x18] sm:$0xff]
    %v187 = vpack.c.bf16 %v180, %v179
    %v188 = vpack.c.bf16 %v182, %v181
    %v189 = vld [vmem:[#allocation7] sm:$0xf]
    %v190 = vld [vmem:[#allocation7 + $0x4] sm:$0xf]
    %v191 = vld [vmem:[#allocation7 + $0x8] sm:$0xf]
    %v192 = vld [vmem:[#allocation7 + $0xc] sm:$0xf]
    %v193 = vld [vmem:[#allocation7 + $0x10] sm:$0xf]
    %v194 = vld [vmem:[#allocation7 + $0x14] sm:$0xf]
    %v195 = vld [vmem:[#allocation7 + $0x18] sm:$0xf]
    %v196 = vld [vmem:[#allocation7 + $0x1c] sm:$0xf]
    %v197 = vld [vmem:[#allocation7 + $0x20] sm:$0xf]
    %v198 = vld [vmem:[#allocation7 + $0x24] sm:$0xf]
    %v199 = vld [vmem:[#allocation7 + $0x28] sm:$0xf]
    %v200 = vld [vmem:[#allocation7 + $0x2c] sm:$0xf]
    %v201 = vld [vmem:[#allocation7 + $0x30] sm:$0xf]
    %v202 = vld [vmem:[#allocation7 + $0x34] sm:$0xf]
    %v203 = vld [vmem:[#allocation7 + $0x38] sm:$0xf]
    %v204 = vld [vmem:[#allocation7 + $0x3c] sm:$0xf]
    %v221 = vunpack.c.l.b16 %v189
    %v222 = vunpack.c.l.b16 %v190
    %v223 = vunpack.c.l.b16 %v191
    %v224 = vunpack.c.l.b16 %v192
    %v225 = vunpack.c.l.b16 %v193
    %v226 = vunpack.c.l.b16 %v194
    %v227 = vunpack.c.l.b16 %v195
    %v228 = vunpack.c.l.b16 %v196
    %v229 = vunpack.c.l.b16 %v197
    %v230 = vunpack.c.l.b16 %v198
    %v231 = vunpack.c.l.b16 %v199
    %v232 = vunpack.c.l.b16 %v200
    %v233 = vunpack.c.l.b16 %v201
    %v234 = vunpack.c.l.b16 %v202
    %v235 = vunpack.c.l.b16 %v203
    %v236 = vunpack.c.l.b16 %v204
    %v237 = vpack.c.b16 %v222, %v221
    %v238 = vpack.c.b16 %v224, %v223
    %v239 = vpack.c.b16 %v226, %v225
    %v240 = vpack.c.b16 %v228, %v227
    %v241 = vpack.c.b16 %v230, %v229
    %v242 = vpack.c.b16 %v232, %v231
    %v243 = vpack.c.b16 %v234, %v233
    %v244 = vpack.c.b16 %v236, %v235
    %253 = vmatpush.bf16.msra.mxu0 %v244
    %254 = vmatpush.bf16.msra.mxu0 %v243
    %255 = vmatpush.bf16.msra.mxu0 %v242
    %256 = vmatpush.bf16.msra.mxu0 %v241
    %257 = vmatpush.bf16.msra.mxu0 %v240
    %258 = vmatpush.bf16.msra.mxu0 %v239
    %259 = vmatpush.bf16.msra.mxu0 %v238
    %260 = vmatpush.bf16.msra.mxu0 %v237
    %261 = vmatmul.bf16.gmra.mxu0 %v187
    %v262 = vpop.f32.mrf.mxu0
    %v263 = vadd.f32 0.0, %v262
    %v264 = vpop.f32.mrf.mxu0
    %v265 = vadd.f32 0.0, %v264
    %266 = vmatmul.bf16.gmra.mxu0 %v188
    %v267 = vpop.f32.mrf.mxu0
    %v268 = vadd.f32 0.0, %v267
    %v269 = vpop.f32.mrf.mxu0
    %v270 = vadd.f32 0.0, %v269
    %271 = vdwg.mxu0
    %v272 = vadd.f32 %v183, %v263
    %v273 = vadd.f32 %v184, %v265
    %v274 = vadd.f32 %v185, %v268
    %v275 = vadd.f32 %v186, %v270
    %276 = vst [vmem:[#allocation8] sm:$0xff] %v272
    %277 = vst [vmem:[#allocation8 + $0x8] sm:$0xff] %v273
    %278 = vst [vmem:[#allocation8 + $0x10] sm:$0xff] %v274
    %279 = vst [vmem:[#allocation8 + $0x18] sm:$0xff] %v275
    // Predicated region
    $region38: #{tpu_custom_call.1} parent=1 // pred_check
      %p280 = pneg %p68
    $region39: #{tpu_custom_call.1} parent=1 // pred_check_branch
      %282 = sbr.rel (%p280) target = $region41
    $region40: #{tpu_custom_call.1} parent=1 // pred_region
      %v283 = vld [vmem:[#allocation8] sm:$0xff]
      %v284 = vld [vmem:[#allocation8 + $0x8] sm:$0xff]
      %v285 = vld [vmem:[#allocation8 + $0x10] sm:$0xff]
      %v286 = vld [vmem:[#allocation8 + $0x18] sm:$0xff]
      %v287 = vld [vmem:[%s4] sm:$0x1]
      %v289 = vperm.slane %v287, 0
      %v291 = vadd.f32 %v283, %v289
      %v292 = vadd.f32 %v284, %v289
      %v293 = vadd.f32 %v285, %v289
      %v294 = vadd.f32 %v286, %v289
      %295 = vst [vmem:[#allocation8] sm:$0xff] %v291
      %296 = vst [vmem:[#allocation8 + $0x8] sm:$0xff] %v292
      %297 = vst [vmem:[#allocation8 + $0x10] sm:$0xff] %v293
      %298 = vst [vmem:[#allocation8 + $0x18] sm:$0xff] %v294
    $region41: #{tpu_custom_call.1} parent=1 // pred_fallthru
      _
    // Predicated region
    $region42: #{tpu_custom_call.1} parent=1 // pred_check
      _
    $region43: #{tpu_custom_call.1} parent=1 // pred_check_branch
      %300 = sbr.rel (0) target = $region45
    $region44: #{tpu_custom_call.1} parent=1 // pred_region
      %302 = vsyncadd [#allocation4], 0
      %s303 = sshll.u32 [#allocation8], 4
      %s304 = int_to_ptr.vmem [resolvable:$true] %s303
      %s305 = sshll.u32 %s5, 4
      %s306 = int_to_ptr.hbm [resolvable:$true] %s305
      %311 = dma.vmem_to_hbm [thread:$0]  %s304, 512, %s306, [#allocation4], 128, 128, 8
    $region45: #{tpu_custom_call.1} parent=1 // pred_fallthru
      _
    // Predicated region
    $region46: #{tpu_custom_call.1} parent=1 // pred_check
      _
    $region47: #{tpu_custom_call.1} parent=1 // pred_check_branch
      %313 = sbr.rel (0) target = $region49
    $region48: #{tpu_custom_call.1} parent=1 // pred_region
      %315 = dma.done [#allocation4], 512
    $region49: #{tpu_custom_call.1} parent=1 // pred_fallthru
      _
    %316 = vsyncpa [#allocation3], 1
    %317 = vsyncpa [#allocation6], 1
    %318 = vsyncpa [#allocation4], 1

</llo_original>
